<compile_context>
chip_gen: v7x
topology: tpu7x:2x2x1
jax: 0.10.0
libtpu: 0.0.40
codegen_flags: <defaults>
</compile_context>

<pallas_src>
import functools

import jax
import jax.numpy as jnp
from jax.experimental import pallas as pl
from jax.experimental.pallas import tpu as pltpu


def _round_up(x, m):
    return ((x + m - 1) // m) * m


def _maybe_pad2d(a, rows, cols):
    pr, pc = rows - a.shape[0], cols - a.shape[1]
    if pr == 0 and pc == 0:
        return a                      # avoid an extra HBM pass when aligned
    return jnp.pad(a, ((0, pr), (0, pc)))


# ---------------------------------------------------------------------------
# Kernel 1: xw = dropout(x) @ W   (row-tiled over N)
# ---------------------------------------------------------------------------
def _xw_kernel(x_ref, w_ref, xw_ref):
    xw_ref[...] = jnp.dot(
        x_ref[...], w_ref[...], preferred_element_type=jnp.float32
    ).astype(xw_ref.dtype)


def _dropout_xw_kernel(x_ref, mask_ref, w_ref, xw_ref, *, inv_keep):
    # Inverted dropout: {0,1} keep-mask, kept values scaled by exact 1/keep.
    scale = mask_ref[...].astype(jnp.float32) * jnp.float32(inv_keep)
    x = x_ref[...] * scale.astype(x_ref.dtype)
    xw_ref[...] = jnp.dot(
        x, w_ref[...], preferred_element_type=jnp.float32
    ).astype(xw_ref.dtype)


# ---------------------------------------------------------------------------
# Kernel 2: out = relu(support @ xw + bias)   ((row, K)-tiled, f32 accumulator)
# ---------------------------------------------------------------------------
def _spmm_bias_relu_kernel(sup_ref, xw_ref, b_ref, out_ref, acc_ref):
    k = pl.program_id(1)

    @pl.when(k == 0)
    def _():
        acc_ref[...] = jnp.zeros_like(acc_ref)

    acc_ref[...] += jnp.dot(
        sup_ref[...],
        xw_ref[...].astype(jnp.float32),
        preferred_element_type=jnp.float32,
    )

    @pl.when(k == pl.num_programs(1) - 1)
    def _():
        acc = acc_ref[...] + b_ref[...]          # (1, Dout) broadcasts
        out_ref[...] = jnp.maximum(acc, 0.0).astype(out_ref.dtype)


# ---------------------------------------------------------------------------
# Wrapper
# ---------------------------------------------------------------------------
def graph_convolution_forward(x, support, weight, bias, key,
                              dropout_p=0.2, tile_n=512,
                              xw_dtype=jnp.bfloat16):
    """Returns (relu(support @ (dropout(x) @ W) + b), support)."""
    assert tile_n % 128 == 0, "tile_n must be a multiple of 128"
    N, Din = x.shape
    Dout = weight.shape[1]

    # Tile / padded sizes (VMEM use is O(tile * Dout_pad), independent of N).
    n_pad = _round_up(N, 128)
    tile = min(int(tile_n), n_pad)
    n_pad = _round_up(n_pad, tile)
    dout_pad = _round_up(Dout, 128)
    num_m = n_pad // tile            # row tiles (kernels 1 and 2)
    num_k = n_pad // tile            # contraction tiles (kernel 2)

    x_p = _maybe_pad2d(x, n_pad, Din)
    w_p = _maybe_pad2d(weight, Din, dout_pad)
    b_p = jnp.pad(bias, (0, dout_pad - Dout)).reshape(1, dout_pad).astype(jnp.float32)
    sup_p = _maybe_pad2d(support, n_pad, n_pad)   # native dtype, no cast pass

    # --- kernel 1: xw = dropout(x) @ W, row-tiled ---------------------------
    x_spec = pl.BlockSpec((tile, Din), lambda i: (i, 0))
    w_spec = pl.BlockSpec((Din, dout_pad), lambda i: (0, 0))
    xw_spec = pl.BlockSpec((tile, dout_pad), lambda i: (i, 0))

    if dropout_p > 0.0:
        # {0,1} keep-mask in bf16 (2 B/elem in HBM); exact f32 1/(1-p) scale
        # applied in-kernel.  Keep prob = 1-p, matching F.dropout semantics.
        # TODO(synk): the mask could be generated fully in-kernel with
        # pltpu.prng_seed/prng_random_bits (zero HBM traffic); kept in the
        # wrapper for robustness.  It cannot bit-match the torch RNG stream.
        keep = jax.random.uniform(key, (N, Din)) >= jnp.float32(dropout_p)
        mask_p = _maybe_pad2d(keep.astype(jnp.bfloat16), n_pad, Din)
        kernel1 = functools.partial(
            _dropout_xw_kernel, inv_keep=1.0 / (1.0 - float(dropout_p)))
        k1_args = (x_p, mask_p, w_p)
        k1_specs = [x_spec, pl.BlockSpec((tile, Din), lambda i: (i, 0)), w_spec]
    else:
        kernel1 = _xw_kernel
        k1_args = (x_p, w_p)
        k1_specs = [x_spec, w_spec]

    xw = pl.pallas_call(
        kernel1,
        out_shape=jax.ShapeDtypeStruct((n_pad, dout_pad), xw_dtype),
        grid=(num_m,),
        in_specs=k1_specs,
        out_specs=xw_spec,
        compiler_params=pltpu.CompilerParams(
            dimension_semantics=("parallel",)),
    )(*k1_args)

    # --- kernel 2: out = relu(support @ xw + b), (row, K)-tiled -------------
    sup_elsize = jnp.dtype(sup_p.dtype).itemsize
    xw_elsize = jnp.dtype(xw_dtype).itemsize
    cost = pl.CostEstimate(
        flops=2 * n_pad * n_pad * dout_pad,
        transcendentals=0,
        bytes_accessed=(n_pad * n_pad * sup_elsize              # support stream
                        + num_m * n_pad * dout_pad * xw_elsize  # xw re-reads
                        + num_m * dout_pad * 4                  # bias
                        + n_pad * dout_pad * 4),                # f32 output
    )
    out = pl.pallas_call(
        _spmm_bias_relu_kernel,
        out_shape=jax.ShapeDtypeStruct((n_pad, dout_pad), jnp.float32),
        grid=(num_m, num_k),
        in_specs=[
            pl.BlockSpec((tile, tile), lambda i, k: (i, k)),      # support
            pl.BlockSpec((tile, dout_pad), lambda i, k: (k, 0)),  # xw
            pl.BlockSpec((1, dout_pad), lambda i, k: (0, 0)),     # bias
        ],
        out_specs=pl.BlockSpec((tile, dout_pad), lambda i, k: (i, 0)),
        scratch_shapes=[pltpu.VMEM((tile, dout_pad), jnp.float32)],
        compiler_params=pltpu.CompilerParams(
            dimension_semantics=("parallel", "arbitrary")),
        cost_estimate=cost,
    )(sup_p, xw, b_p)

    if n_pad == N and dout_pad == Dout:
        return out, support
    return out[:N, :Dout], support


if __name__ == "__main__":
    key = jax.random.PRNGKey(0)
    kx, kadj, kw, kdrop, kx2, kadj2, kw2 = jax.random.split(key, 7)

    def make_inputs(kx_, kadj_, kw_, N, Din, Dout):
        x = jax.random.normal(kx_, (N, Din), jnp.float32)
        adj = (jax.random.uniform(kadj_, (N, N)) < 0.05).astype(jnp.float32)
        adj = jnp.maximum(adj, adj.T) + jnp.eye(N, dtype=jnp.float32)
        deg_inv_sqrt = 1.0 / jnp.sqrt(adj.sum(axis=1))
        support = adj * deg_inv_sqrt[:, None] * deg_inv_sqrt[None, :]
        init_range = jnp.sqrt(6.0 / (Din + Dout))
        weight = jax.random.uniform(kw_, (Din, Dout), jnp.float32,
                                    -init_range, init_range)
        bias = jnp.zeros((Dout,), jnp.float32)
        return x, support, weight, bias

    # 1) Aligned shapes, dropout off: check vs the pure-JAX reference.
    N, Din, Dout = 128, 64, 128
    x, support, weight, bias = make_inputs(kx, kadj, kw, N, Din, Dout)
    out_det, sup_out = graph_convolution_forward(
        x, support, weight, bias, kdrop, dropout_p=0.0)
    out_det = jax.block_until_ready(out_det)
    ref = jnp.maximum(support @ (x @ weight) + bias[None, :], 0.0)
    assert out_det.shape == (N, Dout) and sup_out.shape == (N, N)
    # bf16 xw + default-precision MXU matmuls -> loose tolerance (documented).
    assert jnp.allclose(out_det, ref, atol=2e-2, rtol=2e-2), "mismatch (aligned)"

    # 2) Unaligned shapes + multi-tile (exercises padding, row tiling and the
    #    K-axis accumulator), dropout off, checked vs reference.
    N2, Din2, Dout2 = 200, 64, 72
    x2, support2, weight2, bias2 = make_inputs(kx2, kadj2, kw2, N2, Din2, Dout2)
    out2, _ = graph_convolution_forward(
        x2, support2, weight2, bias2, kdrop, dropout_p=0.0, tile_n=128)
    out2 = jax.block_until_ready(out2)
    ref2 = jnp.maximum(support2 @ (x2 @ weight2) + bias2[None, :], 0.0)
    assert out2.shape == (N2, Dout2)
    assert jnp.allclose(out2, ref2, atol=2e-2, rtol=2e-2), "mismatch (unaligned)"

    # 3) Full module semantics (dropout p=0.2).
    out_drop, _ = graph_convolution_forward(
        x, support, weight, bias, kdrop, dropout_p=0.2)
    out_drop = jax.block_until_ready(out_drop)
    assert out_drop.shape == (N, Dout)
    assert bool(jnp.all(jnp.isfinite(out_drop)))
    assert bool(jnp.all(out_drop >= 0.0))        # ReLU output

    print("KERNEL_OK")
</pallas_src>

<mosaic_0001>
module attributes {stable_mosaic.version = 11 : i64} {
  func.func @_xw_kernel(%arg0: i32, %arg1: memref<128x64xf32, #tpu.memory_space<vmem>>, %arg2: memref<64x128xf32, #tpu.memory_space<vmem>>, %arg3: memref<128x128xbf16, #tpu.memory_space<vmem>>) attributes {dimension_semantics = [#tpu.dimension_semantics<parallel>], iteration_bounds = array<i64: 1>, scalar_prefetch = 0 : i64, scratch_operands = 0 : i64, tpu.core_type = #tpu.core_type<tc>, window_params = [{transform_indices = @transform_0, window_bounds = array<i64: 128, 64>}, {pipeline_mode = #tpu.pipeline_mode<synchronous>, transform_indices = @transform_1, window_bounds = array<i64: 64, 128>}, {transform_indices = @transform_2, window_bounds = array<i64: 128, 128>}]} {
    %c0 = arith.constant 0 : index
    %c0_0 = arith.constant 0 : index
    %0 = vector.load %arg1[%c0, %c0_0] : memref<128x64xf32, #tpu.memory_space<vmem>>, vector<128x64xf32>
    %c0_1 = arith.constant 0 : index
    %c0_2 = arith.constant 0 : index
    %1 = vector.load %arg2[%c0_1, %c0_2] : memref<64x128xf32, #tpu.memory_space<vmem>>, vector<64x128xf32>
    %cst = arith.constant dense<0.000000e+00> : vector<128x128xf32>
    %2 = tpu.matmul %0, %1, %cst {dimension_numbers = #tpu.dot_dimension_numbers<[1], [0], [0], [1], [0, 0, 1, 1], [], []>} : vector<128x64xf32>, vector<64x128xf32>, vector<128x128xf32> -> vector<128x128xf32>
    %3 = arith.truncf %2 : vector<128x128xf32> to vector<128x128xbf16>
    %c0_3 = arith.constant 0 : index
    %c0_4 = arith.constant 0 : index
    %4 = vector.load %arg3[%c0_3, %c0_4] : memref<128x128xbf16, #tpu.memory_space<vmem>>, vector<128x128xbf16>
    tpu.vector_store %arg3[%c0_3, %c0_4], %3 {strides = array<i32>} : memref<128x128xbf16, #tpu.memory_space<vmem>>, vector<128x128xbf16>,
    return
  }
  func.func @transform_0(%arg0: i32) -> (i32, i32) {
    %c0_i32 = arith.constant 0 : i32
    %c0_i32_0 = arith.constant 0 : i32
    return %arg0, %c0_i32 : i32, i32
  }
  func.func @transform_1(%arg0: i32) -> (i32, i32) {
    %c0_i32 = arith.constant 0 : i32
    %c0_i32_0 = arith.constant 0 : i32
    %c0_i32_1 = arith.constant 0 : i32
    return %c0_i32, %c0_i32_0 : i32, i32
  }
  func.func @transform_2(%arg0: i32) -> (i32, i32) {
    %c0_i32 = arith.constant 0 : i32
    %c0_i32_0 = arith.constant 0 : i32
    return %arg0, %c0_i32 : i32, i32
  }
}

</mosaic_0001>

<llo_original>
// kernel: tpu_custom_call.1
$region0: #{tpu_custom_call.1}
  #allocation0 [shape = 'u32[]', space=smem, size = 0x4, offset = 0x4, fixed_abs, tag = 'smem constant byte address 0x4 - core index']
  #allocation1 [shape = 'u32[144,128]{1,0:T(1,128)}', space=vmem, size = 0x12000, scoped, tag = 'internal scratch']
  %s0 = inlined_call_operand.vmem [shape: f32[128,64], index: 0, kind: input, shape index: {}]
  %s1 = inlined_call_operand.vmem [shape: f32[64,128], index: 1, kind: input, shape index: {}]
  %s2 = inlined_call_operand.hbm [shape: bf16[128,128], index: 2, kind: output, shape index: {}]
  %s3 = sld [smem:[#allocation0]]
  $region18: #{tpu_custom_call.1} parent=0
    _
  %s5 = ssub.s32 1, %s3
  %s6 = scalar_select 0, %s5, %s3
  $region1: #{tpu_custom_call.1} parent=0
    #allocation2 [shape = 'u8[32768]{0}', space=vmem, size = 0x8000, scoped, tag = 'output window, operand 0, single buffered']
    #allocation3 [shape = 's32[1]{0}', space=sflag, size = 0x4, scoped, tag = 'scoped memory for tpu_custom_call.1']
    %7 = vsyncpa [#allocation3], 0
    // Predicated region
    $region2: #{tpu_custom_call.1} parent=1 // pred_check
      _
    $region3: #{tpu_custom_call.1} parent=1 // pred_check_branch
      %9 = sbr.rel (0) target = $region5
    $region4: #{tpu_custom_call.1} parent=1 // pred_region
      _
    $region5: #{tpu_custom_call.1} parent=1 // pred_fallthru
      _
    // Predicated region
    $region6: #{tpu_custom_call.1} parent=1 // pred_check
      _
    $region7: #{tpu_custom_call.1} parent=1 // pred_check_branch
      %11 = sbr.rel (0) target = $region9
    $region8: #{tpu_custom_call.1} parent=1 // pred_region
      _
    $region9: #{tpu_custom_call.1} parent=1 // pred_fallthru
      _
    %v12 = vld [vmem:[%s0] sm:$0xff]
    %v13 = vld [vmem:[%s0 + $0x8] sm:$0xff]
    %v14 = vld [vmem:[%s0 + $0x10] sm:$0xff]
    %v15 = vld [vmem:[%s0 + $0x18] sm:$0xff]
    %v16 = vld [vmem:[%s0 + $0x20] sm:$0xff]
    %v17 = vld [vmem:[%s0 + $0x28] sm:$0xff]
    %v18 = vld [vmem:[%s0 + $0x30] sm:$0xff]
    %v19 = vld [vmem:[%s0 + $0x38] sm:$0xff]
    %v20 = vld [vmem:[%s0 + $0x40] sm:$0xff]
    %v21 = vld [vmem:[%s0 + $0x48] sm:$0xff]
    %v22 = vld [vmem:[%s0 + $0x50] sm:$0xff]
    %v23 = vld [vmem:[%s0 + $0x58] sm:$0xff]
    %v24 = vld [vmem:[%s0 + $0x60] sm:$0xff]
    %v25 = vld [vmem:[%s0 + $0x68] sm:$0xff]
    %v26 = vld [vmem:[%s0 + $0x70] sm:$0xff]
    %v27 = vld [vmem:[%s0 + $0x78] sm:$0xff]
    %v28 = vld [vmem:[%s1] sm:$0xff]
    %v29 = vld [vmem:[%s1 + $0x8] sm:$0xff]
    %v30 = vld [vmem:[%s1 + $0x10] sm:$0xff]
    %v31 = vld [vmem:[%s1 + $0x18] sm:$0xff]
    %v32 = vld [vmem:[%s1 + $0x20] sm:$0xff]
    %v33 = vld [vmem:[%s1 + $0x28] sm:$0xff]
    %v34 = vld [vmem:[%s1 + $0x30] sm:$0xff]
    %v35 = vld [vmem:[%s1 + $0x38] sm:$0xff]
    %vm36 = vcmask 523264
    %v38 = vsel %vm36, %v12, 0
    %v41 = vsel %vm36, %v13, 0
    %v44 = vsel %vm36, %v14, 0
    %v47 = vsel %vm36, %v15, 0
    %v50 = vsel %vm36, %v16, 0
    %v53 = vsel %vm36, %v17, 0
    %v56 = vsel %vm36, %v18, 0
    %v59 = vsel %vm36, %v19, 0
    %v62 = vsel %vm36, %v20, 0
    %v65 = vsel %vm36, %v21, 0
    %v68 = vsel %vm36, %v22, 0
    %v71 = vsel %vm36, %v23, 0
    %v74 = vsel %vm36, %v24, 0
    %v77 = vsel %vm36, %v25, 0
    %v80 = vsel %vm36, %v26, 0
    %v83 = vsel %vm36, %v27, 0
    %85 = vmatprep.subr.mxu0 0.0
    %86 = vmatpush1.msra.mxu0 %v28
    %87 = vmatprep.subr.mxu0 0.0
    %88 = vmatpush1.msra.mxu0 %v29
    %89 = vmatprep.subr.mxu0 0.0
    %90 = vmatpush1.msra.mxu0 %v30
    %91 = vmatprep.subr.mxu0 0.0
    %92 = vmatpush1.msra.mxu0 %v31
    %93 = vmatprep.subr.mxu0 0.0
    %94 = vmatpush1.msra.mxu0 %v32
    %95 = vmatprep.subr.mxu0 0.0
    %96 = vmatpush1.msra.mxu0 %v33
    %97 = vmatprep.subr.mxu0 0.0
    %98 = vmatpush1.msra.mxu0 %v34
    %99 = vmatprep.subr.mxu0 0.0
    %100 = vmatpush1.msra.mxu0 %v35
    %101 = vmatprep.subr.mxu0 0.0
    %102 = vmatpush1.msra.mxu0 0.0
    %103 = vmatprep.subr.mxu0 0.0
    %104 = vmatpush1.msra.mxu0 0.0
    %105 = vmatprep.subr.mxu0 0.0
    %106 = vmatpush1.msra.mxu0 0.0
    %107 = vmatprep.subr.mxu0 0.0
    %108 = vmatpush1.msra.mxu0 0.0
    %109 = vmatprep.subr.mxu0 0.0
    %110 = vmatpush1.msra.mxu0 0.0
    %111 = vmatprep.subr.mxu0 0.0
    %112 = vmatpush1.msra.mxu0 0.0
    %113 = vmatprep.subr.mxu0 0.0
    %114 = vmatpush1.msra.mxu0 0.0
    %115 = vmatprep.subr.mxu0 0.0
    %116 = vmatpush1.msra.mxu0 0.0
    %117 = vmatprep.subr.mxu0 0.0
    %118 = vmatpush1.msra.mxu0 0.0
    %119 = vmatprep.subr.mxu0 0.0
    %120 = vmatpush1.msra.mxu0 0.0
    %121 = vmatprep.subr.mxu0 0.0
    %122 = vmatpush1.msra.mxu0 0.0
    %123 = vmatprep.subr.mxu0 0.0
    %124 = vmatpush1.msra.mxu0 0.0
    %125 = vmatprep.subr.mxu0 0.0
    %126 = vmatpush1.msra.mxu0 0.0
    %127 = vmatprep.subr.mxu0 0.0
    %128 = vmatpush1.msra.mxu0 0.0
    %129 = vmatprep.subr.mxu0 0.0
    %130 = vmatpush1.msra.mxu0 0.0
    %131 = vmatprep.subr.mxu0 0.0
    %132 = vmatpush1.msra.mxu0 0.0
    %133 = vmatprep.subr.mxu0 0.0
    %134 = vmatpush1.msra.mxu0 0.0
    %135 = vmatprep.subr.mxu0 0.0
    %136 = vmatpush1.msra.mxu0 0.0
    %137 = vmatprep.subr.mxu0 0.0
    %138 = vmatpush1.msra.mxu0 0.0
    %139 = vmatprep.subr.mxu0 0.0
    %140 = vmatpush1.msra.mxu0 0.0
    %141 = vmatprep.subr.mxu0 0.0
    %142 = vmatpush1.msra.mxu0 0.0
    %143 = vmatprep.subr.mxu0 0.0
    %144 = vmatpush1.msra.mxu0 0.0
    %145 = vmatprep.subr.mxu0 0.0
    %146 = vmatpush1.msra.mxu0 0.0
    %147 = vmatprep.subr.mxu0 0.0
    %148 = vmatpush1.msra.mxu0 0.0
    %149 = vmatprep.mubr.f32.mxu0 0.0
    %150 = vmatmul.mubr.f32.gmra.mrb[0].mxu0 %v38
    %v151 = vpop.f32.mrb[0].mxu0
    %v152 = vadd.f32 0.0, %v151
    %v153 = vpop.f32.mrb[0].mxu0
    %154 = vmatprep.mubr.f32.mxu0 0.0
    %155 = vmatmul.mubr.f32.gmra.mrb[0].mxu0 %v41
    %v156 = vpop.f32.mrb[0].mxu0
    %v157 = vadd.f32 0.0, %v156
    %v158 = vpop.f32.mrb[0].mxu0
    %159 = vmatprep.mubr.f32.mxu0 0.0
    %160 = vmatmul.mubr.f32.gmra.mrb[0].mxu0 %v44
    %v161 = vpop.f32.mrb[0].mxu0
    %v162 = vadd.f32 0.0, %v161
    %v163 = vpop.f32.mrb[0].mxu0
    %164 = vmatprep.mubr.f32.mxu0 0.0
    %165 = vmatmul.mubr.f32.gmra.mrb[0].mxu0 %v47
    %v166 = vpop.f32.mrb[0].mxu0
    %v167 = vadd.f32 0.0, %v166
    %v168 = vpop.f32.mrb[0].mxu0
    %169 = vmatprep.mubr.f32.mxu0 0.0
    %170 = vmatmul.mubr.f32.gmra.mrb[0].mxu0 %v50
    %v171 = vpop.f32.mrb[0].mxu0
    %v172 = vadd.f32 0.0, %v171
    %v173 = vpop.f32.mrb[0].mxu0
    %174 = vmatprep.mubr.f32.mxu0 0.0
    %175 = vmatmul.mubr.f32.gmra.mrb[0].mxu0 %v53
    %v176 = vpop.f32.mrb[0].mxu0
    %v177 = vadd.f32 0.0, %v176
    %v178 = vpop.f32.mrb[0].mxu0
    %179 = vmatprep.mubr.f32.mxu0 0.0
    %180 = vmatmul.mubr.f32.gmra.mrb[0].mxu0 %v56
    %v181 = vpop.f32.mrb[0].mxu0
    %v182 = vadd.f32 0.0, %v181
    %v183 = vpop.f32.mrb[0].mxu0
    %184 = vmatprep.mubr.f32.mxu0 0.0
    %185 = vmatmul.mubr.f32.gmra.mrb[0].mxu0 %v59
    %v186 = vpop.f32.mrb[0].mxu0
    %v187 = vadd.f32 0.0, %v186
    %v188 = vpop.f32.mrb[0].mxu0
    %189 = vmatprep.mubr.f32.mxu0 0.0
    %190 = vmatmul.mubr.f32.gmra.mrb[0].mxu0 %v62
    %v191 = vpop.f32.mrb[0].mxu0
    %v192 = vadd.f32 0.0, %v191
    %v193 = vpop.f32.mrb[0].mxu0
    %194 = vmatprep.mubr.f32.mxu0 0.0
    %195 = vmatmul.mubr.f32.gmra.mrb[0].mxu0 %v65
    %v196 = vpop.f32.mrb[0].mxu0
    %v197 = vadd.f32 0.0, %v196
    %v198 = vpop.f32.mrb[0].mxu0
    %199 = vmatprep.mubr.f32.mxu0 0.0
    %200 = vmatmul.mubr.f32.gmra.mrb[0].mxu0 %v68
    %v201 = vpop.f32.mrb[0].mxu0
    %v202 = vadd.f32 0.0, %v201
    %v203 = vpop.f32.mrb[0].mxu0
    %204 = vmatprep.mubr.f32.mxu0 0.0
    %205 = vmatmul.mubr.f32.gmra.mrb[0].mxu0 %v71
    %v206 = vpop.f32.mrb[0].mxu0
    %v207 = vadd.f32 0.0, %v206
    %v208 = vpop.f32.mrb[0].mxu0
    %209 = vmatprep.mubr.f32.mxu0 0.0
    %210 = vmatmul.mubr.f32.gmra.mrb[0].mxu0 %v74
    %v211 = vpop.f32.mrb[0].mxu0
    %v212 = vadd.f32 0.0, %v211
    %v213 = vpop.f32.mrb[0].mxu0
    %214 = vmatprep.mubr.f32.mxu0 0.0
    %215 = vmatmul.mubr.f32.gmra.mrb[0].mxu0 %v77
    %v216 = vpop.f32.mrb[0].mxu0
    %v217 = vadd.f32 0.0, %v216
    %v218 = vpop.f32.mrb[0].mxu0
    %219 = vmatprep.mubr.f32.mxu0 0.0
    %220 = vmatmul.mubr.f32.gmra.mrb[0].mxu0 %v80
    %v221 = vpop.f32.mrb[0].mxu0
    %v222 = vadd.f32 0.0, %v221
    %v223 = vpop.f32.mrb[0].mxu0
    %224 = vmatprep.mubr.f32.mxu0 0.0
    %225 = vmatmul.mubr.f32.gmra.mrb[0].mxu0 %v83
    %v226 = vpop.f32.mrb[0].mxu0
    %v227 = vadd.f32 0.0, %v226
    %v228 = vpop.f32.mrb[0].mxu0
    %229 = vdwg.mxu0
    %v230 = vpack.c.bf16 %v157, %v152
    %v231 = vpack.c.bf16 %v167, %v162
    %v232 = vpack.c.bf16 %v177, %v172
    %v233 = vpack.c.bf16 %v187, %v182
    %v234 = vpack.c.bf16 %v197, %v192
    %v235 = vpack.c.bf16 %v207, %v202
    %v236 = vpack.c.bf16 %v217, %v212
    %v237 = vpack.c.bf16 %v227, %v222
    %v246 = vunpack.c.l.b16 %v230
    %v247 = vunpack.c.h.b16 %v230
    %v248 = vunpack.c.l.b16 %v231
    %v249 = vunpack.c.h.b16 %v231
    %v250 = vunpack.c.l.b16 %v232
    %v251 = vunpack.c.h.b16 %v232
    %v252 = vunpack.c.l.b16 %v233
    %v253 = vunpack.c.h.b16 %v233
    %v254 = vunpack.c.l.b16 %v234
    %v255 = vunpack.c.h.b16 %v234
    %v256 = vunpack.c.l.b16 %v235
    %v257 = vunpack.c.h.b16 %v235
    %v258 = vunpack.c.l.b16 %v236
    %v259 = vunpack.c.h.b16 %v236
    %v260 = vunpack.c.l.b16 %v237
    %v261 = vunpack.c.h.b16 %v237
    %v262 = vpack.c.b16 %v246, %v246
    %v263 = vpack.c.b16 %v247, %v247
    %v264 = vpack.c.b16 %v248, %v248
    %v265 = vpack.c.b16 %v249, %v249
    %v266 = vpack.c.b16 %v250, %v250
    %v267 = vpack.c.b16 %v251, %v251
    %v268 = vpack.c.b16 %v252, %v252
    %v269 = vpack.c.b16 %v253, %v253
    %v270 = vpack.c.b16 %v254, %v254
    %v271 = vpack.c.b16 %v255, %v255
    %v272 = vpack.c.b16 %v256, %v256
    %v273 = vpack.c.b16 %v257, %v257
    %v274 = vpack.c.b16 %v258, %v258
    %v275 = vpack.c.b16 %v259, %v259
    %v276 = vpack.c.b16 %v260, %v260
    %v277 = vpack.c.b16 %v261, %v261
    %294 = vst [vmem:[#allocation2] sm:$0xf] %v262
    %295 = vst [vmem:[#allocation2 + $0x4] sm:$0xf] %v263
    %296 = vst [vmem:[#allocation2 + $0x8] sm:$0xf] %v264
    %297 = vst [vmem:[#allocation2 + $0xc] sm:$0xf] %v265
    %298 = vst [vmem:[#allocation2 + $0x10] sm:$0xf] %v266
    %299 = vst [vmem:[#allocation2 + $0x14] sm:$0xf] %v267
    %300 = vst [vmem:[#allocation2 + $0x18] sm:$0xf] %v268
    %301 = vst [vmem:[#allocation2 + $0x1c] sm:$0xf] %v269
    %302 = vst [vmem:[#allocation2 + $0x20] sm:$0xf] %v270
    %303 = vst [vmem:[#allocation2 + $0x24] sm:$0xf] %v271
    %304 = vst [vmem:[#allocation2 + $0x28] sm:$0xf] %v272
    %305 = vst [vmem:[#allocation2 + $0x2c] sm:$0xf] %v273
    %306 = vst [vmem:[#allocation2 + $0x30] sm:$0xf] %v274
    %307 = vst [vmem:[#allocation2 + $0x34] sm:$0xf] %v275
    %308 = vst [vmem:[#allocation2 + $0x38] sm:$0xf] %v276
    %309 = vst [vmem:[#allocation2 + $0x3c] sm:$0xf] %v277
    // Predicated region
    $region10: #{tpu_custom_call.1} parent=1 // pred_check
      _
    $region11: #{tpu_custom_call.1} parent=1 // pred_check_branch
      %311 = sbr.rel (0) target = $region13
    $region12: #{tpu_custom_call.1} parent=1 // pred_region
      %s313 = ssub.s32 1024, 1024
      %314 = vsyncadd [#allocation3], %s313
      %s315 = sshll.u32 [#allocation2], 4
      %s316 = int_to_ptr.vmem [resolvable:$true] %s315
      %321 = dma.vmem_to_hbm [thread:$0]  %s316, 1024, %s2, [#allocation3], 64, 64, 4
    $region13: #{tpu_custom_call.1} parent=1 // pred_fallthru
      _
    // Predicated region
    $region14: #{tpu_custom_call.1} parent=1 // pred_check
      _
    $region15: #{tpu_custom_call.1} parent=1 // pred_check_branch
      %323 = sbr.rel (0) target = $region17
    $region16: #{tpu_custom_call.1} parent=1 // pred_region
      %324 = dma.done [#allocation3], 1024
    $region17: #{tpu_custom_call.1} parent=1 // pred_fallthru
      _
    %325 = vsyncpa [#allocation3], 1

</llo_original>
